<compile_context>
chip_gen: v5e
topology: v5e:2x2
jax: 0.10.0
libtpu: 0.0.40
codegen_flags: <defaults>
</compile_context>

<pallas_src>
import functools
import math

import jax
import jax.numpy as jnp
from jax.experimental import pallas as pl
from jax.experimental.pallas import tpu as pltpu

OPENAI_MEAN = (0.48145466, 0.4578275, 0.40821073)
OPENAI_STD = (0.26862954, 0.26130258, 0.27577711)
LN_EPS = 1e-5                   # PyTorch nn.LayerNorm default
ROW_TILE = 512                  # lane-dense row tile for row-gridded kernels
VMEM_LIMIT = 48 * 1024 * 1024   # leaves headroom on v7x's 64 MiB physical VMEM


def _row_tiles(m, tile=ROW_TILE):
    """Row tiling: full-array block when small (no (8,128) issue), else 8-aligned tiles."""
    if m <= tile:
        return m, 1
    return tile, pl.cdiv(m, tile)


def _cparams():
    return pltpu.CompilerParams(dimension_semantics=("parallel",),
                                vmem_limit_bytes=VMEM_LIMIT)


# ----------------------------- Pallas kernels -----------------------------


def _patch_embed_kernel(xp_ref, w_ref, posb_ref, o_ref):
    # xp: (1, T, C*p*p) raw pixels with a ZERO row 0 (cls slot); CLIP normalize is
    # folded into w/posb.  Row 0 of posb = cls_token + pos_embed[0], so the matmul
    # produces the full (T, D) token slab -> one sublane-aligned store.
    x = xp_ref[0].astype(jnp.bfloat16)
    o_ref[0] = (
        jnp.dot(x, w_ref[...], preferred_element_type=jnp.float32) + posb_ref[...]
    )


def _ln_linear_kernel(x_ref, g_ref, b_ref, w_ref, wb_ref, o_ref):
    # LayerNorm (f32 stats) fused with the following linear (bf16 MXU, f32 accum).
    # Gridded over rows; garbage rows of a partial last tile never affect valid rows
    # (row-independent math) and their stores are masked by Pallas.
    x = x_ref[...]
    mu = jnp.mean(x, axis=-1, keepdims=True)
    var = jnp.mean((x - mu) ** 2, axis=-1, keepdims=True)
    h = (x - mu) * jax.lax.rsqrt(var + LN_EPS) * g_ref[...] + b_ref[...]
    o_ref[...] = (
        jnp.dot(h.astype(jnp.bfloat16), w_ref[...], preferred_element_type=jnp.float32)
        + wb_ref[...]
    ).astype(o_ref.dtype)


def _attn_proj_res_kernel(qkv_ref, res_ref, pw_ref, pb_ref, o_ref, acc_ref, *, heads):
    # One batch element per grid step.  qkv: (1, T, 3D) bf16 (softmax scale already
    # folded into the q columns).  Per head: QK^T -> softmax -> PV -> accumulate the
    # out-projection slice into a (T, D) f32 VMEM scratch; one residual+bias store.
    # TODO(synk): for real CLIP T=577, add a q-row grid axis (flash-style) and pair
    # heads into 128-lane MXU operands (Dh=64 -> 128) for v6e/v7x.
    qkv = qkv_ref[0]                       # (T, 3D) bf16
    D = qkv.shape[-1] // 3
    Dh = D // heads
    acc_ref[...] = jnp.zeros_like(acc_ref)
    for h in range(heads):                 # static unroll (heads is small)
        q = qkv[:, h * Dh:(h + 1) * Dh]
        k = qkv[:, D + h * Dh:D + (h + 1) * Dh]
        v = qkv[:, 2 * D + h * Dh:2 * D + (h + 1) * Dh]
        s = jnp.dot(q, k.T, preferred_element_type=jnp.float32)
        s = s - jnp.max(s, axis=-1, keepdims=True)
        p = jnp.exp(s)
        p = p / jnp.sum(p, axis=-1, keepdims=True)
        pv = jnp.dot(p.astype(jnp.bfloat16), v, preferred_element_type=jnp.float32)
        acc_ref[...] += jnp.dot(pv.astype(jnp.bfloat16),
                                pw_ref[h * Dh:(h + 1) * Dh, :],
                                preferred_element_type=jnp.float32)
    o_ref[0] = res_ref[0] + acc_ref[...] + pb_ref[...]


def _ln_mlp_res_kernel(x_ref, g_ref, b_ref, w1_ref, b1_ref, w2_ref, b2_ref, o_ref):
    # LayerNorm -> FC1 -> GELU -> FC2 -> residual, gridded over rows.
    x = x_ref[...]
    mu = jnp.mean(x, axis=-1, keepdims=True)
    var = jnp.mean((x - mu) ** 2, axis=-1, keepdims=True)
    h = (x - mu) * jax.lax.rsqrt(var + LN_EPS) * g_ref[...] + b_ref[...]
    h1 = (
        jnp.dot(h.astype(jnp.bfloat16), w1_ref[...], preferred_element_type=jnp.float32)
        + b1_ref[...]
    )
    # TODO(synk): PyTorch nn.GELU() is exact-erf; tanh approximation used here (EUP-friendly).
    h1 = jax.nn.gelu(h1, approximate=True)
    o_ref[...] = (
        x
        + jnp.dot(h1.astype(jnp.bfloat16), w2_ref[...],
                  preferred_element_type=jnp.float32)
        + b2_ref[...]
    )


def _decode_head_kernel(v_ref, cw_ref, cb_ref, tw_ref, tb_ref, txt_ref,
                        feat_ref, logit_ref, *, logit_scale):
    # MaskClip decode head: value-path out-proj -> text-space proj -> cosine-sim
    # logits against (pre-normalized, lane-padded, pre-transposed) text embeddings.
    v = (
        jnp.dot(v_ref[...].astype(jnp.bfloat16), cw_ref[...],
                preferred_element_type=jnp.float32)
        + cb_ref[...]
    )
    feat = (
        jnp.dot(v.astype(jnp.bfloat16), tw_ref[...],
                preferred_element_type=jnp.float32)
        + tb_ref[...]
    )
    feat_ref[...] = feat
    fn = feat * jax.lax.rsqrt(jnp.sum(feat * feat, axis=-1, keepdims=True) + 1e-12)
    logit_ref[...] = (
        jnp.dot(fn.astype(jnp.bfloat16), txt_ref[...],
                preferred_element_type=jnp.float32)
        * logit_scale
    )


# ----------------------------- kernel wrappers -----------------------------


def patch_embed(xp_ext, w_bf16, pos_bias_ext):
    N, T, Cpp = xp_ext.shape
    D = w_bf16.shape[1]
    return pl.pallas_call(
        _patch_embed_kernel,
        grid=(N,),
        in_specs=[
            pl.BlockSpec((1, T, Cpp), lambda n: (n, 0, 0)),
            pl.BlockSpec((Cpp, D), lambda n: (0, 0)),
            pl.BlockSpec((T, D), lambda n: (0, 0)),
        ],
        out_specs=pl.BlockSpec((1, T, D), lambda n: (n, 0, 0)),
        out_shape=jax.ShapeDtypeStruct((N, T, D), jnp.float32),
        compiler_params=_cparams(),
    )(xp_ext, w_bf16, pos_bias_ext)


def ln_linear(x, g, b, w_bf16, wb, *, out_dtype=jnp.float32):
    M, D = x.shape
    Nout = w_bf16.shape[1]
    tm, gm = _row_tiles(M)
    return pl.pallas_call(
        _ln_linear_kernel,
        grid=(gm,),
        in_specs=[
            pl.BlockSpec((tm, D), lambda i: (i, 0)),
            pl.BlockSpec((1, D), lambda i: (0, 0)),
            pl.BlockSpec((1, D), lambda i: (0, 0)),
            pl.BlockSpec((D, Nout), lambda i: (0, 0)),
            pl.BlockSpec((1, Nout), lambda i: (0, 0)),
        ],
        out_specs=pl.BlockSpec((tm, Nout), lambda i: (i, 0)),
        out_shape=jax.ShapeDtypeStruct((M, Nout), out_dtype),
        compiler_params=_cparams(),
    )(x, g.reshape(1, D), b.reshape(1, D), w_bf16, wb.reshape(1, Nout))


def attn_proj_res(qkv, tokens, pw_bf16, pb, *, heads):
    N, T, threeD = qkv.shape
    D = threeD // 3
    return pl.pallas_call(
        functools.partial(_attn_proj_res_kernel, heads=heads),
        grid=(N,),
        in_specs=[
            pl.BlockSpec((1, T, threeD), lambda n: (n, 0, 0)),
            pl.BlockSpec((1, T, D), lambda n: (n, 0, 0)),
            pl.BlockSpec((D, D), lambda n: (0, 0)),
            pl.BlockSpec((1, D), lambda n: (0, 0)),
        ],
        out_specs=pl.BlockSpec((1, T, D), lambda n: (n, 0, 0)),
        out_shape=jax.ShapeDtypeStruct((N, T, D), jnp.float32),
        scratch_shapes=[pltpu.VMEM((T, D), jnp.float32)],
        compiler_params=_cparams(),
    )(qkv, tokens, pw_bf16, pb.reshape(1, D))


def ln_mlp_res(x, g, b, w1_bf16, b1, w2_bf16, b2):
    M, D = x.shape
    H = w1_bf16.shape[1]
    tm, gm = _row_tiles(M)
    return pl.pallas_call(
        _ln_mlp_res_kernel,
        grid=(gm,),
        in_specs=[
            pl.BlockSpec((tm, D), lambda i: (i, 0)),
            pl.BlockSpec((1, D), lambda i: (0, 0)),
            pl.BlockSpec((1, D), lambda i: (0, 0)),
            pl.BlockSpec((D, H), lambda i: (0, 0)),
            pl.BlockSpec((1, H), lambda i: (0, 0)),
            pl.BlockSpec((H, D), lambda i: (0, 0)),
            pl.BlockSpec((1, D), lambda i: (0, 0)),
        ],
        out_specs=pl.BlockSpec((tm, D), lambda i: (i, 0)),
        out_shape=jax.ShapeDtypeStruct((M, D), jnp.float32),
        compiler_params=_cparams(),
    )(x, g.reshape(1, D), b.reshape(1, D), w1_bf16, b1.reshape(1, H),
      w2_bf16, b2.reshape(1, D))


def decode_head(v_sp, cw_bf16, cb, tw_bf16, tb, txt_t_bf16, *, logit_scale=100.0):
    M, D = v_sp.shape
    Dt = tw_bf16.shape[1]
    Kp = txt_t_bf16.shape[1]          # padded (lane-dense) class axis
    tm, gm = _row_tiles(M)
    return pl.pallas_call(
        functools.partial(_decode_head_kernel, logit_scale=logit_scale),
        grid=(gm,),
        in_specs=[
            pl.BlockSpec((tm, D), lambda i: (i, 0)),
            pl.BlockSpec((D, D), lambda i: (0, 0)),
            pl.BlockSpec((1, D), lambda i: (0, 0)),
            pl.BlockSpec((D, Dt), lambda i: (0, 0)),
            pl.BlockSpec((1, Dt), lambda i: (0, 0)),
            pl.BlockSpec((Dt, Kp), lambda i: (0, 0)),
        ],
        out_specs=(
            pl.BlockSpec((tm, Dt), lambda i: (i, 0)),
            pl.BlockSpec((tm, Kp), lambda i: (i, 0)),
        ),
        out_shape=(
            jax.ShapeDtypeStruct((M, Dt), jnp.float32),
            jax.ShapeDtypeStruct((M, Kp), jnp.float32),
        ),
        compiler_params=_cparams(),
    )(v_sp, cw_bf16, cb.reshape(1, D), tw_bf16, tb.reshape(1, Dt), txt_t_bf16)


# ----------------------------- model definition -----------------------------


def init_params(key, *, in_ch=3, patch=4, dim=32, heads=2, mlp_ratio=4,
                layers=2, num_patches=16, text_dim=32, num_classes=8):
    keys = jax.random.split(key, 8 + layers)
    std = 0.02

    def nrm(k, shape):
        return std * jax.random.normal(k, shape, jnp.float32)

    params = {
        "patch_embed_w": nrm(keys[0], (in_ch * patch * patch, dim)),
        "patch_embed_b": jnp.zeros((dim,), jnp.float32),
        "cls_token": nrm(keys[1], (1, 1, dim)),
        "pos_embed": nrm(keys[2], (1, num_patches + 1, dim)),
        "c_proj_w": nrm(keys[3], (dim, dim)),         # value out-proj (decode head)
        "c_proj_b": jnp.zeros((dim,), jnp.float32),
        "txt_proj_w": nrm(keys[4], (dim, text_dim)),  # visual->text-space projection
        "txt_proj_b": jnp.zeros((text_dim,), jnp.float32),
        "text_emb": nrm(keys[5], (num_classes, text_dim)),  # frozen CLIP text embeddings
        "layers": [],
    }
    hidden = dim * mlp_ratio
    for l in range(layers):
        lk = jax.random.split(keys[8 + l], 4)
        params["layers"].append({
            "ln1_g": jnp.ones((dim,), jnp.float32),
            "ln1_b": jnp.zeros((dim,), jnp.float32),
            "qkv_w": nrm(lk[0], (dim, 3 * dim)),
            "qkv_b": jnp.zeros((3 * dim,), jnp.float32),
            "proj_w": nrm(lk[1], (dim, dim)),
            "proj_b": jnp.zeros((dim,), jnp.float32),
            "ln2_g": jnp.ones((dim,), jnp.float32),
            "ln2_b": jnp.zeros((dim,), jnp.float32),
            "fc1_w": nrm(lk[2], (dim, hidden)),
            "fc1_b": jnp.zeros((hidden,), jnp.float32),
            "fc2_w": nrm(lk[3], (hidden, dim)),
            "fc2_b": jnp.zeros((dim,), jnp.float32),
        })
    return params


def prepare_params(params, *, patch, heads):
    """One-time param prep: fold CLIP normalize into the patch-embed weights, build
    the aligned (cls-as-row-0) positional bias slab, fold the softmax scale into the
    q columns of qkv, pre-normalize + lane-pad + transpose the text embeddings, and
    cast all matmul weights to bf16 (biases / LN params stay f32)."""
    mean = jnp.asarray(OPENAI_MEAN, jnp.float32)
    std = jnp.asarray(OPENAI_STD, jnp.float32)
    inv_std = 1.0 / std
    pp = patch * patch
    # patch rows are flattened (c, ph, pw): channel varies slowest.
    row_scale = jnp.repeat(inv_std, pp)            # (C*p*p,)
    row_shift = jnp.repeat(mean * inv_std, pp)     # (C*p*p,)

    w = params["patch_embed_w"]                    # (C*p*p, D)
    b = params["patch_embed_b"]                    # (D,)
    w_fold = w * row_scale[:, None]                # y = x @ w_fold + b_fold == ((x-m)/s) @ w + b
    b_fold = b - row_shift @ w

    dim = w.shape[1]
    # Row 0 of the bias slab carries the cls token (the matmul row 0 input is zeros),
    # rows 1..P carry pos_embed + folded conv bias -> single aligned (T, D) store.
    cls_row = (params["cls_token"][0, 0] + params["pos_embed"][0, 0])[None, :]
    pos_bias_ext = jnp.concatenate(
        [cls_row, params["pos_embed"][0, 1:] + b_fold[None, :]], axis=0)   # (T, D)

    text = params["text_emb"]
    text_n = text * jax.lax.rsqrt(jnp.sum(text * text, axis=-1, keepdims=True) + 1e-12)
    K, Dt = text.shape
    Kp = ((K + 127) // 128) * 128                 # lane-dense padded class axis
    txt_pad = jnp.zeros((Kp, Dt), jnp.float32).at[:K].set(text_n)

    scale = 1.0 / math.sqrt(dim // heads)

    prep = {
        "patch_w": w_fold.astype(jnp.bfloat16),
        "pos_bias_ext": pos_bias_ext,
        "c_proj_w": params["c_proj_w"].astype(jnp.bfloat16),
        "c_proj_b": params["c_proj_b"],
        "txt_proj_w": params["txt_proj_w"].astype(jnp.bfloat16),
        "txt_proj_b": params["txt_proj_b"],
        "text_pad_t": txt_pad.T.astype(jnp.bfloat16),   # (Dt, Kp), already transposed
        "num_classes": K,
        "dim": dim,
        "layers": [],
    }
    # TODO(synk): on v7x consider fp8 weight quantization for qkv/fc1/fc2/proj.
    for lp in params["layers"]:
        qkv_w = jnp.concatenate([lp["qkv_w"][:, :dim] * scale, lp["qkv_w"][:, dim:]],
                                axis=1)           # softmax scale folded into q columns
        qkv_b = jnp.concatenate([lp["qkv_b"][:dim] * scale, lp["qkv_b"][dim:]])
        prep["layers"].append({
            "ln1_g": lp["ln1_g"], "ln1_b": lp["ln1_b"],
            "qkv_w": qkv_w.astype(jnp.bfloat16), "qkv_b": qkv_b,
            "proj_w": lp["proj_w"].astype(jnp.bfloat16), "proj_b": lp["proj_b"],
            "ln2_g": lp["ln2_g"], "ln2_b": lp["ln2_b"],
            "fc1_w": lp["fc1_w"].astype(jnp.bfloat16), "fc1_b": lp["fc1_b"],
            "fc2_w": lp["fc2_w"].astype(jnp.bfloat16), "fc2_b": lp["fc2_b"],
        })
    return prep


def transformer_block(tokens, lp, *, heads, capture_kv=False):
    N, T, D = tokens.shape
    x2 = tokens.reshape(N * T, D)

    # kernel 1: LN1 + QKV projection (fused, row-gridded, bf16 output -> no f32 round trip)
    qkv2 = ln_linear(x2, lp["ln1_g"], lp["ln1_b"], lp["qkv_w"], lp["qkv_b"],
                     out_dtype=jnp.bfloat16)                       # (N*T, 3D) bf16
    qkv = qkv2.reshape(N, T, 3 * D)

    # kernel 2: multi-head attention + out-projection + residual (fused, per-batch grid)
    tokens = attn_proj_res(qkv, tokens, lp["proj_w"], lp["proj_b"], heads=heads)

    # kernel 3: LN2 + MLP + residual (fused, row-gridded)
    tokens = ln_mlp_res(tokens.reshape(N * T, D), lp["ln2_g"], lp["ln2_b"],
                        lp["fc1_w"], lp["fc1_b"], lp["fc2_w"], lp["fc2_b"]
                        ).reshape(N, T, D)

    if capture_kv:
        k_merged = qkv[:, :, D:2 * D]          # heads concatenated (bf16)
        v_merged = qkv[:, :, 2 * D:3 * D]
        return tokens, k_merged, v_merged
    return tokens


def maskclip_forward(x_nchw, prep, *, patch=4, heads=2, return_feat=False):
    N, C, H, W = x_nchw.shape
    Hp, Wp = H // patch, W // patch
    P = Hp * Wp
    D = prep["dim"]
    K = prep["num_classes"]

    # CLIP normalization is folded into the patch-embed weights/bias.
    # TODO(synk): at real image sizes, express this patchify via the patch-embed
    # kernel's input BlockSpec index_map instead of an XLA 6-D transpose.
    xp = x_nchw.reshape(N, C, Hp, patch, Wp, patch)
    xp = xp.transpose(0, 2, 4, 1, 3, 5).reshape(N, P, C * patch * patch)
    xp = jnp.pad(xp, ((0, 0), (1, 0), (0, 0)))        # zero row 0 = cls slot (aligned store)

    tok = patch_embed(xp, prep["patch_w"], prep["pos_bias_ext"])   # (N, T, D)

    k_last = v_last = None
    n_layers = len(prep["layers"])
    for li, lp in enumerate(prep["layers"]):
        if li == n_layers - 1:
            tok, k_last, v_last = transformer_block(tok, lp, heads=heads,
                                                    capture_kv=True)
        else:
            tok = transformer_block(tok, lp, heads=heads)

    # MaskClip decode head (fused, row-gridded): value path -> out-proj ->
    # text-space proj -> cosine similarity with (pre-normalized) text embeddings.
    v_sp = v_last[:, 1:, :].reshape(N * P, D)                 # drop cls token
    k_sp = k_last[:, 1:, :].astype(jnp.float32).reshape(N, Hp, Wp, D).transpose(0, 3, 1, 2)
    feat, logits_pad = decode_head(v_sp, prep["c_proj_w"], prep["c_proj_b"],
                                   prep["txt_proj_w"], prep["txt_proj_b"],
                                   prep["text_pad_t"], logit_scale=100.0)
    logits = logits_pad[:, :K]                                # strip lane padding

    seg_logits = logits.reshape(N, Hp, Wp, K).transpose(0, 3, 1, 2)
    feats = feat.reshape(N, Hp, Wp, -1).transpose(0, 3, 1, 2)
    # TODO(synk): upsampling of seg_logits to the input resolution happens in the
    # segmentor post-processing (F.interpolate), not in this module's forward.
    if return_feat:
        return seg_logits, feats, k_sp
    return seg_logits


# ----------------------------- main -----------------------------

if __name__ == "__main__":
    key = jax.random.PRNGKey(0)
    kx, kp = jax.random.split(key)

    # small config: batch=2, RGB, 16x16 images, patch=4 -> 4x4 patch grid,
    # dim=32, 2 heads, 2 layers, 8 classes.
    x = jax.random.uniform(kx, (2, 3, 16, 16), jnp.float32)   # images in [0,1]
    params = init_params(kp, in_ch=3, patch=4, dim=32, heads=2, mlp_ratio=4,
                         layers=2, num_patches=16, text_dim=32, num_classes=8)
    prep = prepare_params(params, patch=4, heads=2)

    seg_logits = maskclip_forward(x, prep, patch=4, heads=2)
    jax.block_until_ready(seg_logits)
    assert seg_logits.shape == (2, 8, 4, 4), seg_logits.shape
    print("KERNEL_OK")
</pallas_src>

<mosaic_0001>
module attributes {stable_mosaic.version = 11 : i64} {
  func.func @_patch_embed_kernel(%arg0: i32, %arg1: memref<1x17x48xf32, #tpu.memory_space<vmem>>, %arg2: memref<48x32xbf16, #tpu.memory_space<vmem>>, %arg3: memref<17x32xf32, #tpu.memory_space<vmem>>, %arg4: memref<1x17x32xf32, #tpu.memory_space<vmem>>) attributes {dimension_semantics = [#tpu.dimension_semantics<parallel>], iteration_bounds = array<i64: 2>, scalar_prefetch = 0 : i64, scratch_operands = 0 : i64, tpu.core_type = #tpu.core_type<tc>, window_params = [{transform_indices = @transform_0, window_bounds = array<i64: 1, 17, 48>}, {pipeline_mode = #tpu.pipeline_mode<synchronous>, transform_indices = @transform_1, window_bounds = array<i64: 48, 32>}, {pipeline_mode = #tpu.pipeline_mode<synchronous>, transform_indices = @transform_2, window_bounds = array<i64: 17, 32>}, {transform_indices = @transform_3, window_bounds = array<i64: 1, 17, 32>}]} {
    %c0 = arith.constant 0 : index
    %c0_0 = arith.constant 0 : index
    %c0_1 = arith.constant 0 : index
    %0 = vector.load %arg1[%c0, %c0_0, %c0_1] : memref<1x17x48xf32, #tpu.memory_space<vmem>>, vector<1x17x48xf32>
    %1 = vector.shape_cast %0 : vector<1x17x48xf32> to vector<17x48xf32>
    %2 = arith.truncf %1 : vector<17x48xf32> to vector<17x48xbf16>
    %c0_2 = arith.constant 0 : index
    %c0_3 = arith.constant 0 : index
    %3 = vector.load %arg2[%c0_2, %c0_3] : memref<48x32xbf16, #tpu.memory_space<vmem>>, vector<48x32xbf16>
    %cst = arith.constant dense<0.000000e+00> : vector<17x32xf32>
    %4 = tpu.matmul %2, %3, %cst {dimension_numbers = #tpu.dot_dimension_numbers<[1], [0], [0], [1], [0, 0, 1, 1], [], []>} : vector<17x48xbf16>, vector<48x32xbf16>, vector<17x32xf32> -> vector<17x32xf32>
    %c0_4 = arith.constant 0 : index
    %c0_5 = arith.constant 0 : index
    %5 = vector.load %arg3[%c0_4, %c0_5] : memref<17x32xf32, #tpu.memory_space<vmem>>, vector<17x32xf32>
    %6 = arith.addf %4, %5 : vector<17x32xf32>
    %c0_6 = arith.constant 0 : index
    %c0_7 = arith.constant 0 : index
    %c0_8 = arith.constant 0 : index
    %7 = vector.load %arg4[%c0_6, %c0_7, %c0_8] : memref<1x17x32xf32, #tpu.memory_space<vmem>>, vector<1x17x32xf32>
    %8 = vector.shape_cast %7 : vector<1x17x32xf32> to vector<17x32xf32>
    %9 = vector.shape_cast %6 : vector<17x32xf32> to vector<1x17x32xf32>
    tpu.vector_store %arg4[%c0_6, %c0_7, %c0_8], %9 {strides = array<i32>} : memref<1x17x32xf32, #tpu.memory_space<vmem>>, vector<1x17x32xf32>,
    return
  }
  func.func @transform_0(%arg0: i32) -> (i32, i32, i32) {
    %c0_i32 = arith.constant 0 : i32
    %c0_i32_0 = arith.constant 0 : i32
    %c0_i32_1 = arith.constant 0 : i32
    return %arg0, %c0_i32, %c0_i32_0 : i32, i32, i32
  }
  func.func @transform_1(%arg0: i32) -> (i32, i32) {
    %c0_i32 = arith.constant 0 : i32
    %c0_i32_0 = arith.constant 0 : i32
    %c0_i32_1 = arith.constant 0 : i32
    return %c0_i32, %c0_i32_0 : i32, i32
  }
  func.func @transform_2(%arg0: i32) -> (i32, i32) {
    %c0_i32 = arith.constant 0 : i32
    %c0_i32_0 = arith.constant 0 : i32
    %c0_i32_1 = arith.constant 0 : i32
    return %c0_i32, %c0_i32_0 : i32, i32
  }
  func.func @transform_3(%arg0: i32) -> (i32, i32, i32) {
    %c0_i32 = arith.constant 0 : i32
    %c0_i32_0 = arith.constant 0 : i32
    %c0_i32_1 = arith.constant 0 : i32
    return %arg0, %c0_i32, %c0_i32_0 : i32, i32, i32
  }
}

</mosaic_0001>

<llo_original>
// kernel: tpu_custom_call.1
$region0: #{tpu_custom_call.1}
  #allocation0 [shape = 'u32[]', space=smem, size = 0x4, offset = 0x4, fixed_abs, tag = 'smem constant byte address 0x4 - core index']
  #allocation1 [shape = 'u32[72,128]{1,0:T(1,128)}', space=vmem, size = 0x9000, scoped, tag = 'internal scratch']
  %s0 = inlined_call_operand.vmem [shape: f32[2,17,48], index: 0, kind: input, shape index: {}]
  %s1 = inlined_call_operand.vmem [shape: bf16[48,32], index: 1, kind: input, shape index: {}]
  %s2 = inlined_call_operand.vmem [shape: f32[17,32], index: 2, kind: input, shape index: {}]
  %s3 = inlined_call_operand.vmem [shape: f32[2,17,32], index: 3, kind: output, shape index: {}]
  %s4 = sld [smem:[#allocation0]]
  $region45: #{tpu_custom_call.1} parent=0
    _
  %s6 = ssub.s32 1, %s4
  %s7 = scalar_select 0, %s6, %s4
  loop: start=0, step=1, limit=4
  $region2: #{tpu_custom_call.1} parent=0 // loop_pre_header
    _
  $region3: #{tpu_custom_call.1} parent=0 // loop_header
    %s9 = sphi 0, %s13
    %p10 = scmp.ge.s32.totalorder %s9, 4
    %s19 = sphi 0, %s21
    %s22 = sphi 0, %s19
    %s23 = sphi 0, %s22
    %s39 = sphi 0, %s23
    %s43 = sphi 0, %s43
    %s45 = sphi 0, %s43
    %s46 = sphi 0, %s45
    %s60 = sphi 0, %s46
    %s64 = sphi 0, %s64
    %s66 = sphi 0, %s64
    %s67 = sphi 0, %s66
    %s81 = sphi 0, %s67
    %s87 = sphi 0, %s89
    %s90 = sphi 0, %s87
    %s91 = sphi 0, %s90
    %s107 = sphi 0, %s91
  $region4: #{tpu_custom_call.1} parent=0 // loop_header_branch
    %12 = sbr.rel (%p10) target = $region8
  $region5: #{tpu_custom_call.1} parent=0 // loop_body
    %s14 = ssub.s32 %s9, 1
    %s15 = ssub.s32 %s9, 2
    %s16 = sadd.s32 %s9, 1
    %s17 = ssub.s32 %s9, %s16
    %p18 = scmp.eq.s32.totalorder %s17, 0
    %s20 = sadd.s32 %s19, 1
    %s21 = scalar_select %p18, %s19, %s20
    %p24 = pneg %p18
    %p25 = scmp.eq.s32.totalorder %s9, 1
    %p26 = por %p24, %p25
    %p27 = scmp.ne.s32.totalorder %s19, %s22
    %p28 = scmp.eq.s32.totalorder %s9, 0
    %p29 = por %p27, %p28
    %p30 = scmp.ne.s32.totalorder %s19, %s22
    %p31 = scmp.eq.s32.totalorder %s14, 1
    %p32 = por %p30, %p31
    %p33 = scmp.ne.s32.totalorder %s22, %s23
    %p34 = scmp.eq.s32.totalorder %s14, 0
    %p35 = por %p33, %p34
    %p36 = scmp.ne.s32.totalorder %s22, %s23
    %p37 = scmp.eq.s32.totalorder %s15, 1
    %p38 = por %p36, %p37
    %p40 = scmp.ne.s32.totalorder %s23, %s39
    %p41 = scmp.eq.s32.totalorder %s15, 0
    %p42 = por %p40, %p41
    %s44 = sadd.s32 %s43, 1
    %p47 = scmp.eq.s32.totalorder %s9, 1
    %p48 = scmp.ne.s32.totalorder %s43, %s45
    %p49 = scmp.eq.s32.totalorder %s9, 0
    %p50 = por %p48, %p49
    %p51 = scmp.ne.s32.totalorder %s43, %s45
    %p52 = scmp.eq.s32.totalorder %s14, 1
    %p53 = por %p51, %p52
    %p54 = scmp.ne.s32.totalorder %s45, %s46
    %p55 = scmp.eq.s32.totalorder %s14, 0
    %p56 = por %p54, %p55
    %p57 = scmp.ne.s32.totalorder %s45, %s46
    %p58 = scmp.eq.s32.totalorder %s15, 1
    %p59 = por %p57, %p58
    %p61 = scmp.ne.s32.totalorder %s46, %s60
    %p62 = scmp.eq.s32.totalorder %s15, 0
    %p63 = por %p61, %p62
    %s65 = sadd.s32 %s64, 1
    %p68 = scmp.eq.s32.totalorder %s9, 1
    %p69 = scmp.ne.s32.totalorder %s64, %s66
    %p70 = scmp.eq.s32.totalorder %s9, 0
    %p71 = por %p69, %p70
    %p72 = scmp.ne.s32.totalorder %s64, %s66
    %p73 = scmp.eq.s32.totalorder %s14, 1
    %p74 = por %p72, %p73
    %p75 = scmp.ne.s32.totalorder %s66, %s67
    %p76 = scmp.eq.s32.totalorder %s14, 0
    %p77 = por %p75, %p76
    %p78 = scmp.ne.s32.totalorder %s66, %s67
    %p79 = scmp.eq.s32.totalorder %s15, 1
    %p80 = por %p78, %p79
    %p82 = scmp.ne.s32.totalorder %s67, %s81
    %p83 = scmp.eq.s32.totalorder %s15, 0
    %p84 = por %p82, %p83
    %s85 = ssub.s32 %s9, %s16
    %p86 = scmp.eq.s32.totalorder %s85, 0
    %s88 = sadd.s32 %s87, 1
    %s89 = scalar_select %p86, %s87, %s88
    %p92 = pneg %p86
    %p93 = scmp.eq.s32.totalorder %s9, 1
    %p94 = por %p92, %p93
    %p95 = scmp.ne.s32.totalorder %s87, %s90
    %p96 = scmp.eq.s32.totalorder %s9, 0
    %p97 = por %p95, %p96
    %p98 = scmp.ne.s32.totalorder %s87, %s90
    %p99 = scmp.eq.s32.totalorder %s14, 1
    %p100 = por %p98, %p99
    %p101 = scmp.ne.s32.totalorder %s90, %s91
    %p102 = scmp.eq.s32.totalorder %s14, 0
    %p103 = por %p101, %p102
    %p104 = scmp.ne.s32.totalorder %s90, %s91
    %p105 = scmp.eq.s32.totalorder %s15, 1
    %p106 = por %p104, %p105
    %p108 = scmp.ne.s32.totalorder %s91, %s107
    %p109 = scmp.eq.s32.totalorder %s15, 0
    %p110 = por %p108, %p109
    %p111 = scmp.le.s32.totalorder 1, %s9
    %p112 = scmp.lt.s32.totalorder %s9, 3
    %p113 = pnand %p111, %p112
    %p114 = pneg %p113
    // Predicated region
    $region9: #{tpu_custom_call.1} parent=5 // pred_check
      _
    $region10: #{tpu_custom_call.1} parent=5 // pred_check_branch
      %116 = sbr.rel (%p113) target = $region12
    $region11: #{tpu_custom_call.1} parent=5 // pred_region
      %s117 = ssub.s32 %s9, 1
      // Predicated region
      $region13: #{tpu_custom_call.1} parent=11 // pred_check
        %p118 = pneg %p56
      $region14: #{tpu_custom_call.1} parent=11 // pred_check_branch
        %120 = sbr.rel (%p118) target = $region16
      $region15: #{tpu_custom_call.1} parent=11 // pred_region
        _
      $region16: #{tpu_custom_call.1} parent=11 // pred_fallthru
        _
      // Predicated region
      $region17: #{tpu_custom_call.1} parent=11 // pred_check
        %p121 = pneg %p77
      $region18: #{tpu_custom_call.1} parent=11 // pred_check_branch
        %123 = sbr.rel (%p121) target = $region20
      $region19: #{tpu_custom_call.1} parent=11 // pred_region
        _
      $region20: #{tpu_custom_call.1} parent=11 // pred_fallthru
        _
    $region12: #{tpu_custom_call.1} parent=5 // pred_fallthru
      _
    %p124 = scmp.lt.s32.totalorder %s9, 2
    // Predicated region
    $region21: #{tpu_custom_call.1} parent=5 // pred_check
      %p125 = pneg %p124
    $region22: #{tpu_custom_call.1} parent=5 // pred_check_branch
      %127 = sbr.rel (%p125) target = $region24
    $region23: #{tpu_custom_call.1} parent=5 // pred_region
      // Predicated region
      $region25: #{tpu_custom_call.1} parent=23 // pred_check
        %p128 = pneg %p29
      $region26: #{tpu_custom_call.1} parent=23 // pred_check_branch
        %130 = sbr.rel (%p128) target = $region28
      $region27: #{tpu_custom_call.1} parent=23 // pred_region
        %p131 = scmp.lt.s32.totalorder %s9, 1
        %s132 = scalar_select %p131, %s9, 1
        %s133 = smul.addr %s132, 3
        %s134 = smul.addr %s133, 8
        %s135 = scalar_lea.vmem %s0, %s134
      $region28: #{tpu_custom_call.1} parent=23 // pred_fallthru
        _
    $region24: #{tpu_custom_call.1} parent=5 // pred_fallthru
      _
    %p136 = scmp.le.s32.totalorder 1, %s9
    %p137 = scmp.lt.s32.totalorder %s9, 3
    %p138 = pnand %p136, %p137
    %p139 = pneg %p138
    // Predicated region
    $region29: #{tpu_custom_call.1} parent=5 // pred_check
      _
    $region30: #{tpu_custom_call.1} parent=5 // pred_check_branch
      %141 = sbr.rel (%p138) target = $region32
    $region31: #{tpu_custom_call.1} parent=5 // pred_region
      %s142 = ssub.s32 %s9, 1
      %p143 = scmp.lt.s32.totalorder %s14, 1
      %s144 = scalar_select %p143, %s14, 1
      %s145 = smul.addr %s144, 3
      %s146 = smul.addr %s145, 8
      %s147 = scalar_lea.vmem %s0, %s146
      %p148 = pneg %p35
      %p149 = pneg %p32
      %p150 = pneg %p56
      %p151 = pneg %p53
      %p152 = pneg %p77
      %p153 = pneg %p74
      %p154 = pneg %p103
      %p155 = pneg %p100
      %p156 = scmp.lt.s32.totalorder %s14, 1
      %s157 = scalar_select %p156, %s14, 1
      %s158 = smul.addr %s157, 3
      %s159 = smul.addr %s158, 8
      %s160 = scalar_lea.vmem %s3, %s159
      %p161 = scmp.lt.s32.totalorder %s14, 1
      %s162 = scalar_select %p161, %s14, 1
      %s163 = smul.addr %s162, 3
      %s164 = smul.addr %s163, 8
      %s165 = scalar_lea.vmem %s0, %s164
      %p166 = scmp.lt.s32.totalorder %s14, 1
      %s167 = scalar_select %p166, %s14, 1
      %s168 = smul.addr %s167, 3
      %s169 = smul.addr %s168, 8
      %s170 = scalar_lea.vmem %s3, %s169
      %v172 = vld [vmem:[%s165] sm:$0xff]
      %v173 = vld [vmem:[%s165 + $0x8] sm:$0xff]
      %v174 = vld [vmem:[%s165 + $0x10] sm:$0x1]
      %v175 = vpack.c.bf16 %v173, %v172
      %v176 = vpack.c.bf16 %v174, %v174
      %v177 = vld [vmem:[%s1] sm:$0xf]
      %v178 = vld [vmem:[%s1 + $0x4] sm:$0xf]
      %v179 = vld [vmem:[%s1 + $0x8] sm:$0xf]
      %v180 = vld [vmem:[%s1 + $0xc] sm:$0xf]
      %v181 = vld [vmem:[%s1 + $0x10] sm:$0xf]
      %v182 = vld [vmem:[%s1 + $0x14] sm:$0xf]
      %v183 = vld [vmem:[%s2] sm:$0xff]
      %v184 = vld [vmem:[%s2 + $0x8] sm:$0xff]
      %v185 = vld [vmem:[%s2 + $0x10] sm:$0x1]
      %v192 = vunpack.c.l.b16 %v177
      %v193 = vunpack.c.l.b16 %v178
      %v194 = vunpack.c.l.b16 %v179
      %v195 = vunpack.c.l.b16 %v180
      %v196 = vunpack.c.l.b16 %v181
      %v197 = vunpack.c.l.b16 %v182
      %v198 = vpack.c.b16 %v193, %v192
      %v199 = vpack.c.b16 %v195, %v194
      %v200 = vpack.c.b16 %v197, %v196
      %vm204 = vcmask 392192
      %v206 = vsel %vm204, %v175, 0
      %v209 = vsel %vm204, %v176, 0
      %211 = vmatpush.bf16.msra.mxu0 0
      %212 = vmatpush.bf16.msra.mxu0 0
      %213 = vmatpush.bf16.msra.mxu0 0
      %214 = vmatpush.bf16.msra.mxu0 0
      %215 = vmatpush.bf16.msra.mxu0 0
      %216 = vmatpush.bf16.msra.mxu0 %v200
      %217 = vmatpush.bf16.msra.mxu0 %v199
      %218 = vmatpush.bf16.msra.mxu0 %v198
      %219 = vmatmul.bf16.gmra.mxu0 %v206
      %v220 = vpop.f32.mrf.mxu0
      %v221 = vadd.f32 %v183, %v220
      %v222 = vpop.f32.mrf.mxu0
      %v223 = vadd.f32 %v184, %v222
      %224 = vmatmul.bf16.gmra.mxu0 %v209
      %v225 = vpop.f32.mrf.mxu0
      %v226 = vadd.f32 %v185, %v225
      %v227 = vpop.f32.mrf.mxu0
      %228 = vdwg.mxu0
      %vm229 = vcmask 261120
      %230 = vst.msk [vmem:[%s170] sm:$0xff] %vm229, %v221
      %231 = vst.msk [vmem:[%s170 + $0x8] sm:$0xff] %vm229, %v223
      %vm232 = vcmask 253952
      %233 = vst.msk [vmem:[%s170 + $0x10] sm:$0x1] %vm232, %v226
      %p234 = scmp.lt.s32.totalorder %s14, 1
      %s235 = scalar_select %p234, %s14, 1
      %s236 = smul.addr %s235, 3
      %s237 = smul.addr %s236, 8
      %s238 = scalar_lea.vmem %s3, %s237
      // Predicated region
      $region33: #{tpu_custom_call.1} parent=31 // pred_check
        %p239 = pneg %p100
      $region34: #{tpu_custom_call.1} parent=31 // pred_check_branch
        %241 = sbr.rel (%p239) target = $region36
      $region35: #{tpu_custom_call.1} parent=31 // pred_region
        _
      $region36: #{tpu_custom_call.1} parent=31 // pred_fallthru
        _
    $region32: #{tpu_custom_call.1} parent=5 // pred_fallthru
      _
    %p242 = scmp.le.s32.totalorder 2, %s9
    // Predicated region
    $region37: #{tpu_custom_call.1} parent=5 // pred_check
      %p243 = pneg %p242
    $region38: #{tpu_custom_call.1} parent=5 // pred_check_branch
      %245 = sbr.rel (%p243) target = $region40
    $region39: #{tpu_custom_call.1} parent=5 // pred_region
      %s246 = ssub.s32 %s9, 2
      // Predicated region
      $region41: #{tpu_custom_call.1} parent=39 // pred_check
        %p247 = pneg %p106
      $region42: #{tpu_custom_call.1} parent=39 // pred_check_branch
        %249 = sbr.rel (%p247) target = $region44
      $region43: #{tpu_custom_call.1} parent=39 // pred_region
        %p250 = scmp.lt.s32.totalorder %s15, 1
        %s251 = scalar_select %p250, %s15, 1
        %s252 = smul.addr %s251, 3
        %s253 = smul.addr %s252, 8
        %s254 = scalar_lea.vmem %s3, %s253
      $region44: #{tpu_custom_call.1} parent=39 // pred_fallthru
        _
    $region40: #{tpu_custom_call.1} parent=5 // pred_fallthru
      _
  $region6: #{tpu_custom_call.1} parent=0 // loop_footer
    %s13 = sadd.s32 1, %s9
  $region7: #{tpu_custom_call.1} parent=0 // loop_footer_branch
    %8 = sbr.rel target = $region3
  $region8: #{tpu_custom_call.1} parent=0 // loop_exit
    _

</llo_original>
